<compile_context>
chip_gen: v7x
topology: tpu7x:2x2x1
jax: 0.10.0
libtpu: 0.0.40
codegen_flags: <defaults>
</compile_context>

<pallas_src>
from functools import partial

import jax
import jax.numpy as jnp
from jax.experimental import pallas as pl
from jax.experimental.pallas import tpu as pltpu


def _implicit_module_kernel(z0_ref, x_ref, nf_ref, wcat_ref, w_ref, ub_ref,
                            rmc_ref, rmct_ref, out_ref, *, alpha, n_layers):
    """Single invocation: unrolled loop over all Implicit_Func layers.

    z0_ref  : [N, H]      initial state
    x_ref   : [N, H]      input node features
    nf_ref  : [N, 1]      norm_factor
    wcat_ref: [L, 2H, H]  per layer  concat([W.weight.T, U.weight.T], axis=0)
    w_ref   : [L, H, H]   per layer  W.weight (torch [out, in] layout)
    ub_ref  : [L, 1, H]   per layer  U.bias
    rmc_ref : [E, N]      signed incidence  onehot(row) - onehot(col)
    rmct_ref: [N, E]      its transpose (precomputed in the wrapper)
    out_ref : [N, H]      final z
    """
    nf = nf_ref[...]                                     # [N, 1]
    mask = (nf != 0.0).astype(jnp.float32)               # [N, 1]
    xm = mask * x_ref[...]                               # [N, H], layer-invariant
    rmc = rmc_ref[...]                                   # [E, N]
    rmct = rmct_ref[...]                                 # [N, E]
    z = z0_ref[...]                                      # [N, H]

    for layer in range(n_layers):                        # static -> fully unrolled
        Wcat = wcat_ref[layer]                           # [2H, H]
        W = w_ref[layer]                                 # [H, H]
        Ub = ub_ref[layer]                               # [1, H]

        # rescale=True, double_linear=True:
        #   M = nf*(W z) + nf*degree*(U x),  degree = 1/nf with inf -> 0
        # nf*degree == mask (1 where nf != 0 else 0), so fuse into one matmul:
        #   M = [nf*z , mask*x] @ [W^T ; Uw^T] + mask*Ub
        zcat = jnp.concatenate([nf * z, xm], axis=-1)    # [N, 2H]
        M = (jnp.dot(zcat, Wcat, preferred_element_type=jnp.float32)
             + mask * Ub)                                # [N, H]

        # per-edge difference M[row] - M[col]; act='tanh', norm=Identity
        D = jnp.tanh(jnp.dot(rmc, M,
                             preferred_element_type=jnp.float32))     # [E, H]

        # scatter_add(D*nf[row], row) - scatter_add(D*nf[col], col)
        #   == nf * (RmC^T @ D)
        agg = nf * jnp.dot(rmct, D,
                           preferred_element_type=jnp.float32)        # [N, H]

        # new_z = -F.linear(agg, W.weight.t()) = -(agg @ W.weight)
        new_z = -jnp.dot(agg, W, preferred_element_type=jnp.float32)

        # dropout (p=0) is identity;  z <- alpha*new_z + (1-alpha)*z
        z = alpha * new_z + (1.0 - alpha) * z

    out_ref[...] = z


def make_implicit_module_forward(edge_index, norm_factor, params, alpha):
    """Hoist all constant construction; return a jitted forward(z, x)."""
    row, col = edge_index
    N = norm_factor.shape[0]
    E = row.shape[0]

    # layer-invariant signed incidence matrix (built ONCE, reused every call)
    RmC = (jax.nn.one_hot(row, N, dtype=jnp.float32)
           - jax.nn.one_hot(col, N, dtype=jnp.float32))                # [E, N]
    RmCT = RmC.T                                                       # [N, E]
    nf = norm_factor.reshape(N, 1).astype(jnp.float32)

    Ws, Wcats, Ubs = [], [], []
    for (W, Uw, Ub) in params:
        assert W.shape[0] == Uw.shape[0], \
            "middle_channel must equal hidden_channel (required by the module)"
        Ws.append(W)                                                   # [H, H]
        Wcats.append(jnp.concatenate([W.T, Uw.T], axis=0))             # [2H, H]
        Ubs.append(Ub.reshape(1, -1))                                  # [1, H]
    Ws = jnp.stack(Ws)                                                 # [L, H, H]
    Wcats = jnp.stack(Wcats)                                           # [L, 2H, H]
    Ubs = jnp.stack(Ubs)                                               # [L, 1, H]
    L, H2, H = Wcats.shape

    kernel = partial(_implicit_module_kernel, alpha=float(alpha), n_layers=L)

    grid_spec = pltpu.PrefetchScalarGridSpec(
        num_scalar_prefetch=0,
        grid=(1,),                       # single step; layers unrolled in-kernel
        in_specs=[
            pl.BlockSpec((N, H), lambda i: (0, 0)),          # z0
            pl.BlockSpec((N, H), lambda i: (0, 0)),          # x
            pl.BlockSpec((N, 1), lambda i: (0, 0)),          # nf
            pl.BlockSpec((L, H2, H), lambda i: (0, 0, 0)),   # Wcat (all layers)
            pl.BlockSpec((L, H, H), lambda i: (0, 0, 0)),    # W    (all layers)
            pl.BlockSpec((L, 1, H), lambda i: (0, 0, 0)),    # Ub   (all layers)
            pl.BlockSpec((E, N), lambda i: (0, 0)),          # RmC
            pl.BlockSpec((N, E), lambda i: (0, 0)),          # RmC^T
        ],
        out_specs=pl.BlockSpec((N, H), lambda i: (0, 0)),
    )

    fwd = pl.pallas_call(
        kernel,
        out_shape=jax.ShapeDtypeStruct((N, H), jnp.float32),
        grid_spec=grid_spec,
        compiler_params=pltpu.CompilerParams(
            dimension_semantics=("arbitrary",)),
    )

    @jax.jit
    def forward(z, x):
        return fwd(z, x, nf, Wcats, Ws, Ubs, RmC, RmCT)

    return forward


def reference_forward(z, x, edge_index, norm_factor, params, alpha):
    """Pure-JAX reference mirroring the PyTorch forward exactly."""
    row, col = edge_index
    N = x.shape[0]
    nf = norm_factor.reshape(N, 1)
    for (W, Uw, Ub) in params:
        degree = jnp.where(nf == 0.0, 0.0, 1.0 / nf)
        WzUx = z @ W.T + degree * (x @ Uw.T + Ub)
        WzUx = nf * WzUx
        e = jnp.tanh(WzUx[row] - WzUx[col])
        new_z = (jnp.zeros_like(z).at[row].add(e * nf[row])
                 - jnp.zeros_like(z).at[col].add(e * nf[col]))
        new_z = -(new_z @ W)
        z = alpha * new_z + (1.0 - alpha) * z
    return z


if __name__ == "__main__":
    N, H, Hm, E = 16, 32, 32, 32          # nodes, hidden, middle, edges
    n_layers = 2
    alpha = 0.5

    key = jax.random.PRNGKey(0)
    keys = jax.random.split(key, 8 + 3 * n_layers)

    z = jax.random.normal(keys[0], (N, H), dtype=jnp.float32)
    x = jax.random.normal(keys[1], (N, H), dtype=jnp.float32)
    row = jax.random.randint(keys[2], (E,), 0, N)
    col = jax.random.randint(keys[3], (E,), 0, N)
    edge_index = (row, col)
    norm_factor = jax.random.uniform(keys[4], (N, 1), minval=0.5, maxval=1.5,
                                     dtype=jnp.float32)
    # exercise the inf -> 0 branch of rescale
    norm_factor = norm_factor.at[0, 0].set(0.0)

    params = []
    for layer in range(n_layers):
        kw, kuw, kub = keys[5 + 3 * layer: 8 + 3 * layer]
        W = jax.random.normal(kw, (H, H), dtype=jnp.float32) / jnp.sqrt(H)
        Uw = jax.random.normal(kuw, (Hm, H), dtype=jnp.float32) / jnp.sqrt(H)
        Ub = jax.random.normal(kub, (Hm,), dtype=jnp.float32) * 0.1
        params.append((W, Uw, Ub))

    # constants / weight stacks built once; forward reused for every call
    forward = make_implicit_module_forward(edge_index, norm_factor, params,
                                           alpha)
    out = forward(z, x)
    out = jax.block_until_ready(out)

    ref = reference_forward(z, x, edge_index, norm_factor, params, alpha)
    assert out.shape == (N, H)
    assert jnp.allclose(out, ref, atol=1e-4, rtol=1e-4), \
        f"max abs err {jnp.max(jnp.abs(out - ref))}"

    print("KERNEL_OK")
</pallas_src>

<mosaic_0001>
module attributes {stable_mosaic.version = 11 : i64} {
  func.func @_implicit_module_kernel(%arg0: i32, %arg1: memref<16x32xf32, #tpu.memory_space<vmem>>, %arg2: memref<16x32xf32, #tpu.memory_space<vmem>>, %arg3: memref<16x1xf32, #tpu.memory_space<vmem>>, %arg4: memref<2x64x32xf32, #tpu.memory_space<vmem>>, %arg5: memref<2x32x32xf32, #tpu.memory_space<vmem>>, %arg6: memref<2x1x32xf32, #tpu.memory_space<vmem>>, %arg7: memref<32x16xf32, #tpu.memory_space<vmem>>, %arg8: memref<16x32xf32, #tpu.memory_space<vmem>>, %arg9: memref<16x32xf32, #tpu.memory_space<vmem>>) attributes {dimension_semantics = [#tpu.dimension_semantics<arbitrary>], iteration_bounds = array<i64: 1>, scalar_prefetch = 0 : i64, scratch_operands = 0 : i64, tpu.core_type = #tpu.core_type<tc>, window_params = [{pipeline_mode = #tpu.pipeline_mode<synchronous>, transform_indices = @transform_0, window_bounds = array<i64: 16, 32>}, {pipeline_mode = #tpu.pipeline_mode<synchronous>, transform_indices = @transform_1, window_bounds = array<i64: 16, 32>}, {pipeline_mode = #tpu.pipeline_mode<synchronous>, transform_indices = @transform_2, window_bounds = array<i64: 16, 1>}, {pipeline_mode = #tpu.pipeline_mode<synchronous>, transform_indices = @transform_3, window_bounds = array<i64: 2, 64, 32>}, {pipeline_mode = #tpu.pipeline_mode<synchronous>, transform_indices = @transform_4, window_bounds = array<i64: 2, 32, 32>}, {pipeline_mode = #tpu.pipeline_mode<synchronous>, transform_indices = @transform_5, window_bounds = array<i64: 2, 1, 32>}, {pipeline_mode = #tpu.pipeline_mode<synchronous>, transform_indices = @transform_6, window_bounds = array<i64: 32, 16>}, {pipeline_mode = #tpu.pipeline_mode<synchronous>, transform_indices = @transform_7, window_bounds = array<i64: 16, 32>}, {pipeline_mode = #tpu.pipeline_mode<synchronous>, transform_indices = @transform_8, window_bounds = array<i64: 16, 32>}]} {
    %c0 = arith.constant 0 : index
    %c0_0 = arith.constant 0 : index
    %0 = vector.load %arg3[%c0, %c0_0] : memref<16x1xf32, #tpu.memory_space<vmem>>, vector<16x1xf32>
    %cst = arith.constant 0.000000e+00 : f32
    %1 = vector.broadcast %cst : f32 to vector<16x1xf32>
    %2 = arith.cmpf one, %0, %1 : vector<16x1xf32>
    %3 = arith.extui %2 : vector<16x1xi1> to vector<16x1xi32>
    %4 = arith.sitofp %3 : vector<16x1xi32> to vector<16x1xf32>
    %c0_1 = arith.constant 0 : index
    %c0_2 = arith.constant 0 : index
    %5 = vector.load %arg2[%c0_1, %c0_2] : memref<16x32xf32, #tpu.memory_space<vmem>>, vector<16x32xf32>
    %6 = vector.broadcast %4 : vector<16x1xf32> to vector<16x32xf32>
    %7 = arith.mulf %6, %5 : vector<16x32xf32>
    %c0_3 = arith.constant 0 : index
    %c0_4 = arith.constant 0 : index
    %8 = vector.load %arg7[%c0_3, %c0_4] : memref<32x16xf32, #tpu.memory_space<vmem>>, vector<32x16xf32>
    %c0_5 = arith.constant 0 : index
    %c0_6 = arith.constant 0 : index
    %9 = vector.load %arg8[%c0_5, %c0_6] : memref<16x32xf32, #tpu.memory_space<vmem>>, vector<16x32xf32>
    %c0_7 = arith.constant 0 : index
    %c0_8 = arith.constant 0 : index
    %10 = vector.load %arg1[%c0_7, %c0_8] : memref<16x32xf32, #tpu.memory_space<vmem>>, vector<16x32xf32>
    %c0_9 = arith.constant 0 : index
    %c0_10 = arith.constant 0 : index
    %c0_11 = arith.constant 0 : index
    %11 = vector.load %arg4[%c0_9, %c0_10, %c0_11] : memref<2x64x32xf32, #tpu.memory_space<vmem>>, vector<1x64x32xf32>
    %12 = vector.shape_cast %11 : vector<1x64x32xf32> to vector<64x32xf32>
    %c0_12 = arith.constant 0 : index
    %c0_13 = arith.constant 0 : index
    %c0_14 = arith.constant 0 : index
    %13 = vector.load %arg5[%c0_12, %c0_13, %c0_14] : memref<2x32x32xf32, #tpu.memory_space<vmem>>, vector<1x32x32xf32>
    %14 = vector.shape_cast %13 : vector<1x32x32xf32> to vector<32x32xf32>
    %c0_15 = arith.constant 0 : index
    %c0_16 = arith.constant 0 : index
    %c0_17 = arith.constant 0 : index
    %15 = vector.load %arg6[%c0_15, %c0_16, %c0_17] : memref<2x1x32xf32, #tpu.memory_space<vmem>>, vector<1x1x32xf32>
    %16 = vector.shape_cast %15 : vector<1x1x32xf32> to vector<1x32xf32>
    %17 = vector.broadcast %0 : vector<16x1xf32> to vector<16x32xf32>
    %18 = arith.mulf %17, %10 : vector<16x32xf32>
    %19 = tpu.concatenate %18, %7 in 1 : vector<16x32xf32>, vector<16x32xf32> -> vector<16x64xf32>
    %cst_18 = arith.constant dense<0.000000e+00> : vector<16x32xf32>
    %20 = tpu.matmul %19, %12, %cst_18 {dimension_numbers = #tpu.dot_dimension_numbers<[1], [0], [0], [1], [0, 0, 1, 1], [], []>} : vector<16x64xf32>, vector<64x32xf32>, vector<16x32xf32> -> vector<16x32xf32>
    %21 = vector.broadcast %4 : vector<16x1xf32> to vector<16x32xf32>
    %22 = vector.broadcast %16 : vector<1x32xf32> to vector<16x32xf32>
    %23 = arith.mulf %21, %22 : vector<16x32xf32>
    %24 = arith.addf %20, %23 : vector<16x32xf32>
    %cst_19 = arith.constant dense<0.000000e+00> : vector<32x32xf32>
    %25 = tpu.matmul %8, %24, %cst_19 {dimension_numbers = #tpu.dot_dimension_numbers<[1], [0], [0], [1], [0, 0, 1, 1], [], []>} : vector<32x16xf32>, vector<16x32xf32>, vector<32x32xf32> -> vector<32x32xf32>
    %26 = math.tanh %25 : vector<32x32xf32>
    %cst_20 = arith.constant dense<0.000000e+00> : vector<16x32xf32>
    %27 = tpu.matmul %9, %26, %cst_20 {dimension_numbers = #tpu.dot_dimension_numbers<[1], [0], [0], [1], [0, 0, 1, 1], [], []>} : vector<16x32xf32>, vector<32x32xf32>, vector<16x32xf32> -> vector<16x32xf32>
    %28 = vector.broadcast %0 : vector<16x1xf32> to vector<16x32xf32>
    %29 = arith.mulf %28, %27 : vector<16x32xf32>
    %cst_21 = arith.constant dense<0.000000e+00> : vector<16x32xf32>
    %30 = tpu.matmul %29, %14, %cst_21 {dimension_numbers = #tpu.dot_dimension_numbers<[1], [0], [0], [1], [0, 0, 1, 1], [], []>} : vector<16x32xf32>, vector<32x32xf32>, vector<16x32xf32> -> vector<16x32xf32>
    %cst_22 = arith.constant 0.000000e+00 : f32
    %31 = vector.broadcast %cst_22 : f32 to vector<16x32xf32>
    %32 = arith.subf %31, %30 : vector<16x32xf32>
    %cst_23 = arith.constant 5.000000e-01 : f32
    %33 = vector.broadcast %cst_23 : f32 to vector<16x32xf32>
    %34 = arith.mulf %33, %32 : vector<16x32xf32>
    %cst_24 = arith.constant 5.000000e-01 : f32
    %35 = vector.broadcast %cst_24 : f32 to vector<16x32xf32>
    %36 = arith.mulf %35, %10 : vector<16x32xf32>
    %37 = arith.addf %34, %36 : vector<16x32xf32>
    %c1 = arith.constant 1 : index
    %c0_25 = arith.constant 0 : index
    %c0_26 = arith.constant 0 : index
    %38 = vector.load %arg4[%c1, %c0_25, %c0_26] : memref<2x64x32xf32, #tpu.memory_space<vmem>>, vector<1x64x32xf32>
    %39 = vector.shape_cast %38 : vector<1x64x32xf32> to vector<64x32xf32>
    %c1_27 = arith.constant 1 : index
    %c0_28 = arith.constant 0 : index
    %c0_29 = arith.constant 0 : index
    %40 = vector.load %arg5[%c1_27, %c0_28, %c0_29] : memref<2x32x32xf32, #tpu.memory_space<vmem>>, vector<1x32x32xf32>
    %41 = vector.shape_cast %40 : vector<1x32x32xf32> to vector<32x32xf32>
    %c1_30 = arith.constant 1 : index
    %c0_31 = arith.constant 0 : index
    %c0_32 = arith.constant 0 : index
    %42 = vector.load %arg6[%c1_30, %c0_31, %c0_32] : memref<2x1x32xf32, #tpu.memory_space<vmem>>, vector<1x1x32xf32>
    %43 = vector.shape_cast %42 : vector<1x1x32xf32> to vector<1x32xf32>
    %44 = vector.broadcast %0 : vector<16x1xf32> to vector<16x32xf32>
    %45 = arith.mulf %44, %37 : vector<16x32xf32>
    %46 = tpu.concatenate %45, %7 in 1 : vector<16x32xf32>, vector<16x32xf32> -> vector<16x64xf32>
    %cst_33 = arith.constant dense<0.000000e+00> : vector<16x32xf32>
    %47 = tpu.matmul %46, %39, %cst_33 {dimension_numbers = #tpu.dot_dimension_numbers<[1], [0], [0], [1], [0, 0, 1, 1], [], []>} : vector<16x64xf32>, vector<64x32xf32>, vector<16x32xf32> -> vector<16x32xf32>
    %48 = vector.broadcast %4 : vector<16x1xf32> to vector<16x32xf32>
    %49 = vector.broadcast %43 : vector<1x32xf32> to vector<16x32xf32>
    %50 = arith.mulf %48, %49 : vector<16x32xf32>
    %51 = arith.addf %47, %50 : vector<16x32xf32>
    %cst_34 = arith.constant dense<0.000000e+00> : vector<32x32xf32>
    %52 = tpu.matmul %8, %51, %cst_34 {dimension_numbers = #tpu.dot_dimension_numbers<[1], [0], [0], [1], [0, 0, 1, 1], [], []>} : vector<32x16xf32>, vector<16x32xf32>, vector<32x32xf32> -> vector<32x32xf32>
    %53 = math.tanh %52 : vector<32x32xf32>
    %cst_35 = arith.constant dense<0.000000e+00> : vector<16x32xf32>
    %54 = tpu.matmul %9, %53, %cst_35 {dimension_numbers = #tpu.dot_dimension_numbers<[1], [0], [0], [1], [0, 0, 1, 1], [], []>} : vector<16x32xf32>, vector<32x32xf32>, vector<16x32xf32> -> vector<16x32xf32>
    %55 = vector.broadcast %0 : vector<16x1xf32> to vector<16x32xf32>
    %56 = arith.mulf %55, %54 : vector<16x32xf32>
    %cst_36 = arith.constant dense<0.000000e+00> : vector<16x32xf32>
    %57 = tpu.matmul %56, %41, %cst_36 {dimension_numbers = #tpu.dot_dimension_numbers<[1], [0], [0], [1], [0, 0, 1, 1], [], []>} : vector<16x32xf32>, vector<32x32xf32>, vector<16x32xf32> -> vector<16x32xf32>
    %cst_37 = arith.constant 0.000000e+00 : f32
    %58 = vector.broadcast %cst_37 : f32 to vector<16x32xf32>
    %59 = arith.subf %58, %57 : vector<16x32xf32>
    %cst_38 = arith.constant 5.000000e-01 : f32
    %60 = vector.broadcast %cst_38 : f32 to vector<16x32xf32>
    %61 = arith.mulf %60, %59 : vector<16x32xf32>
    %cst_39 = arith.constant 5.000000e-01 : f32
    %62 = vector.broadcast %cst_39 : f32 to vector<16x32xf32>
    %63 = arith.mulf %62, %37 : vector<16x32xf32>
    %64 = arith.addf %61, %63 : vector<16x32xf32>
    %c0_40 = arith.constant 0 : index
    %c0_41 = arith.constant 0 : index
    %65 = vector.load %arg9[%c0_40, %c0_41] : memref<16x32xf32, #tpu.memory_space<vmem>>, vector<16x32xf32>
    tpu.vector_store %arg9[%c0_40, %c0_41], %64 {strides = array<i32>} : memref<16x32xf32, #tpu.memory_space<vmem>>, vector<16x32xf32>,
    return
  }
  func.func @transform_0(%arg0: i32) -> (i32, i32) {
    %c0_i32 = arith.constant 0 : i32
    %c0_i32_0 = arith.constant 0 : i32
    %c0_i32_1 = arith.constant 0 : i32
    return %c0_i32, %c0_i32_0 : i32, i32
  }
  func.func @transform_1(%arg0: i32) -> (i32, i32) {
    %c0_i32 = arith.constant 0 : i32
    %c0_i32_0 = arith.constant 0 : i32
    %c0_i32_1 = arith.constant 0 : i32
    return %c0_i32, %c0_i32_0 : i32, i32
  }
  func.func @transform_2(%arg0: i32) -> (i32, i32) {
    %c0_i32 = arith.constant 0 : i32
    %c0_i32_0 = arith.constant 0 : i32
    %c0_i32_1 = arith.constant 0 : i32
    return %c0_i32, %c0_i32_0 : i32, i32
  }
  func.func @transform_3(%arg0: i32) -> (i32, i32, i32) {
    %c0_i32 = arith.constant 0 : i32
    %c0_i32_0 = arith.constant 0 : i32
    %c0_i32_1 = arith.constant 0 : i32
    %c0_i32_2 = arith.constant 0 : i32
    return %c0_i32, %c0_i32_0, %c0_i32_1 : i32, i32, i32
  }
  func.func @transform_4(%arg0: i32) -> (i32, i32, i32) {
    %c0_i32 = arith.constant 0 : i32
    %c0_i32_0 = arith.constant 0 : i32
    %c0_i32_1 = arith.constant 0 : i32
    %c0_i32_2 = arith.constant 0 : i32
    return %c0_i32, %c0_i32_0, %c0_i32_1 : i32, i32, i32
  }
  func.func @transform_5(%arg0: i32) -> (i32, i32, i32) {
    %c0_i32 = arith.constant 0 : i32
    %c0_i32_0 = arith.constant 0 : i32
    %c0_i32_1 = arith.constant 0 : i32
    %c0_i32_2 = arith.constant 0 : i32
    return %c0_i32, %c0_i32_0, %c0_i32_1 : i32, i32, i32
  }
  func.func @transform_6(%arg0: i32) -> (i32, i32) {
    %c0_i32 = arith.constant 0 : i32
    %c0_i32_0 = arith.constant 0 : i32
    %c0_i32_1 = arith.constant 0 : i32
    return %c0_i32, %c0_i32_0 : i32, i32
  }
  func.func @transform_7(%arg0: i32) -> (i32, i32) {
    %c0_i32 = arith.constant 0 : i32
    %c0_i32_0 = arith.constant 0 : i32
    %c0_i32_1 = arith.constant 0 : i32
    return %c0_i32, %c0_i32_0 : i32, i32
  }
  func.func @transform_8(%arg0: i32) -> (i32, i32) {
    %c0_i32 = arith.constant 0 : i32
    %c0_i32_0 = arith.constant 0 : i32
    %c0_i32_1 = arith.constant 0 : i32
    return %c0_i32, %c0_i32_0 : i32, i32
  }
}

</mosaic_0001>

<llo_original>
// kernel: forward.1
$region0: #{forward.1}
  #allocation0 [shape = 'u32[]', space=smem, size = 0x4, offset = 0x4, fixed_abs, tag = 'smem constant byte address 0x4 - core index']
  #allocation1 [shape = 'u32[144,128]{1,0:T(1,128)}', space=vmem, size = 0x12000, scoped, tag = 'internal scratch']
  %s0 = inlined_call_operand.hbm [shape: f32[16,32], index: 0, kind: input, shape index: {}]
  %s1 = inlined_call_operand.hbm [shape: f32[16,32], index: 1, kind: input, shape index: {}]
  %s2 = inlined_call_operand.hbm [shape: f32[16,1], index: 2, kind: input, shape index: {}]
  %s3 = inlined_call_operand.hbm [shape: f32[2,64,32], index: 3, kind: input, shape index: {}]
  %s4 = inlined_call_operand.hbm [shape: f32[2,32,32], index: 4, kind: input, shape index: {}]
  %s5 = inlined_call_operand.vmem [shape: f32[2,1,32], index: 5, kind: input, shape index: {}]
  %s6 = inlined_call_operand.hbm [shape: f32[32,16], index: 6, kind: input, shape index: {}]
  %s7 = inlined_call_operand.vmem [shape: f32[16,32], index: 7, kind: input, shape index: {}]
  %s8 = inlined_call_operand.hbm [shape: f32[16,32], index: 8, kind: output, shape index: {}]
  %s9 = sld [smem:[#allocation0]]
  $region66: #{forward.1} parent=0
    _
  %s11 = ssub.s32 1, %s9
  %s12 = scalar_select 0, %s11, %s9
  $region1: #{forward.1} parent=0
    #allocation2 [shape = 'u8[8192]{0}', space=vmem, size = 0x2000, scoped, tag = 'input window, operand 0, single buffered']
    #allocation3 [shape = 's32[1]{0}', space=sflag, size = 0x4, scoped, tag = 'scoped memory for forward.1']
    #allocation4 [shape = 's32[1]{0}', space=sflag, size = 0x4, scoped, tag = 'scoped memory for forward.1']
    #allocation5 [shape = 'u8[8192]{0}', space=vmem, size = 0x2000, scoped, tag = 'input window, operand 1, single buffered']
    #allocation6 [shape = 's32[1]{0}', space=sflag, size = 0x4, scoped, tag = 'scoped memory for forward.1']
    #allocation7 [shape = 'u8[8192]{0}', space=vmem, size = 0x2000, scoped, tag = 'input window, operand 2, single buffered']
    #allocation8 [shape = 'u8[65536]{0}', space=vmem, size = 0x10000, scoped, tag = 'input window, operand 3, single buffered']
    #allocation9 [shape = 's32[1]{0}', space=sflag, size = 0x4, scoped, tag = 'scoped memory for forward.1']
    #allocation10 [shape = 'u8[32768]{0}', space=vmem, size = 0x8000, scoped, tag = 'input window, operand 4, single buffered']
    #allocation11 [shape = 'u8[16384]{0}', space=vmem, size = 0x4000, scoped, tag = 'input window, operand 6, single buffered']
    #allocation12 [shape = 's32[1]{0}', space=sflag, size = 0x4, scoped, tag = 'scoped memory for forward.1']
    #allocation13 [shape = 'u8[8192]{0}', space=vmem, size = 0x2000, scoped, tag = 'output window, operand 0, single buffered']
    %13 = vsyncpa [#allocation3], 0
    %14 = vsyncpa [#allocation6], 0
    %15 = vsyncpa [#allocation9], 0
    %16 = vsyncpa [#allocation12], 0
    %17 = vsyncpa [#allocation4], 0
    // Predicated region
    $region2: #{forward.1} parent=1 // pred_check
      _
    $region3: #{forward.1} parent=1 // pred_check_branch
      %19 = sbr.rel (0) target = $region5
    $region4: #{forward.1} parent=1 // pred_region
      %s21 = ssub.s32 256, 256
      %22 = vsyncadd [#allocation3], %s21
      %s23 = sshll.u32 [#allocation2], 4
      %s24 = int_to_ptr.vmem [resolvable:$true] %s23
      %29 = dma.hbm_to_vmem [thread:$0]  %s0, 256, %s24, [#allocation3], 128, 128, 8
    $region5: #{forward.1} parent=1 // pred_fallthru
      _
    // Predicated region
    $region6: #{forward.1} parent=1 // pred_check
      _
    $region7: #{forward.1} parent=1 // pred_check_branch
      %31 = sbr.rel (0) target = $region9
    $region8: #{forward.1} parent=1 // pred_region
      %s33 = ssub.s32 256, 256
      %34 = vsyncadd [#allocation6], %s33
      %s35 = sshll.u32 [#allocation5], 4
      %s36 = int_to_ptr.vmem [resolvable:$true] %s35
      %41 = dma.hbm_to_vmem [thread:$0]  %s1, 256, %s36, [#allocation6], 128, 128, 8
    $region9: #{forward.1} parent=1 // pred_fallthru
      _
    // Predicated region
    $region10: #{forward.1} parent=1 // pred_check
      _
    $region11: #{forward.1} parent=1 // pred_check_branch
      %43 = sbr.rel (0) target = $region13
    $region12: #{forward.1} parent=1 // pred_region
      %s45 = ssub.s32 256, 256
      %46 = vsyncadd [#allocation6], %s45
      %s47 = sshll.u32 [#allocation7], 4
      %s48 = int_to_ptr.vmem [resolvable:$true] %s47
      %53 = dma.hbm_to_vmem [thread:$0]  %s2, 256, %s48, [#allocation6], 128, 128, 8
    $region13: #{forward.1} parent=1 // pred_fallthru
      _
    // Predicated region
    $region14: #{forward.1} parent=1 // pred_check
      _
    $region15: #{forward.1} parent=1 // pred_check_branch
      %55 = sbr.rel (0) target = $region17
    $region16: #{forward.1} parent=1 // pred_region
      %s57 = ssub.s32 2048, 2048
      %58 = vsyncadd [#allocation9], %s57
      %s59 = sshll.u32 [#allocation8], 4
      %s60 = int_to_ptr.vmem [resolvable:$true] %s59
      %65 = dma.hbm_to_vmem [thread:$0]  %s3, 2048, %s60, [#allocation9], 128, 128, 8
    $region17: #{forward.1} parent=1 // pred_fallthru
      _
    // Predicated region
    $region18: #{forward.1} parent=1 // pred_check
      _
    $region19: #{forward.1} parent=1 // pred_check_branch
      %67 = sbr.rel (0) target = $region21
    $region20: #{forward.1} parent=1 // pred_region
      %s69 = ssub.s32 1024, 1024
      %70 = vsyncadd [#allocation9], %s69
      %s71 = sshll.u32 [#allocation10], 4
      %s72 = int_to_ptr.vmem [resolvable:$true] %s71
      %77 = dma.hbm_to_vmem [thread:$0]  %s4, 1024, %s72, [#allocation9], 128, 128, 8
    $region21: #{forward.1} parent=1 // pred_fallthru
      _
    // Predicated region
    $region22: #{forward.1} parent=1 // pred_check
      _
    $region23: #{forward.1} parent=1 // pred_check_branch
      %79 = sbr.rel (0) target = $region25
    $region24: #{forward.1} parent=1 // pred_region
      _
    $region25: #{forward.1} parent=1 // pred_fallthru
      _
    // Predicated region
    $region26: #{forward.1} parent=1 // pred_check
      _
    $region27: #{forward.1} parent=1 // pred_check_branch
      %81 = sbr.rel (0) target = $region29
    $region28: #{forward.1} parent=1 // pred_region
      %s83 = ssub.s32 512, 512
      %84 = vsyncadd [#allocation12], %s83
      %s85 = sshll.u32 [#allocation11], 4
      %s86 = int_to_ptr.vmem [resolvable:$true] %s85
      %91 = dma.hbm_to_vmem [thread:$0]  %s6, 512, %s86, [#allocation12], 128, 128, 8
    $region29: #{forward.1} parent=1 // pred_fallthru
      _
    // Predicated region
    $region30: #{forward.1} parent=1 // pred_check
      _
    $region31: #{forward.1} parent=1 // pred_check_branch
      %93 = sbr.rel (0) target = $region33
    $region32: #{forward.1} parent=1 // pred_region
      _
    $region33: #{forward.1} parent=1 // pred_fallthru
      _
    // Predicated region
    $region34: #{forward.1} parent=1 // pred_check
      _
    $region35: #{forward.1} parent=1 // pred_check_branch
      %95 = sbr.rel (0) target = $region37
    $region36: #{forward.1} parent=1 // pred_region
      %96 = dma.done [#allocation3], 256
    $region37: #{forward.1} parent=1 // pred_fallthru
      _
    // Predicated region
    $region38: #{forward.1} parent=1 // pred_check
      _
    $region39: #{forward.1} parent=1 // pred_check_branch
      %98 = sbr.rel (0) target = $region41
    $region40: #{forward.1} parent=1 // pred_region
      %99 = dma.done [#allocation6], 256
    $region41: #{forward.1} parent=1 // pred_fallthru
      _
    // Predicated region
    $region42: #{forward.1} parent=1 // pred_check
      _
    $region43: #{forward.1} parent=1 // pred_check_branch
      %101 = sbr.rel (0) target = $region45
    $region44: #{forward.1} parent=1 // pred_region
      %102 = dma.done [#allocation6], 256
    $region45: #{forward.1} parent=1 // pred_fallthru
      _
    // Predicated region
    $region46: #{forward.1} parent=1 // pred_check
      _
    $region47: #{forward.1} parent=1 // pred_check_branch
      %104 = sbr.rel (0) target = $region49
    $region48: #{forward.1} parent=1 // pred_region
      %105 = dma.done [#allocation9], 2048
    $region49: #{forward.1} parent=1 // pred_fallthru
      _
    // Predicated region
    $region50: #{forward.1} parent=1 // pred_check
      _
    $region51: #{forward.1} parent=1 // pred_check_branch
      %107 = sbr.rel (0) target = $region53
    $region52: #{forward.1} parent=1 // pred_region
      %108 = dma.done [#allocation9], 1024
    $region53: #{forward.1} parent=1 // pred_fallthru
      _
    // Predicated region
    $region54: #{forward.1} parent=1 // pred_check
      _
    $region55: #{forward.1} parent=1 // pred_check_branch
      %110 = sbr.rel (0) target = $region57
    $region56: #{forward.1} parent=1 // pred_region
      %111 = dma.done [#allocation12], 512
    $region57: #{forward.1} parent=1 // pred_fallthru
      _
    %v112 = vld [vmem:[#allocation7] sm:$0xff]
    %v113 = vld [vmem:[#allocation7 + $0x8] sm:$0xff]
    %vm114 = vcmp.ne.f32.partialorder %v112, 0.0
    %vm115 = vcmp.ne.f32.partialorder %v113, 0.0
    %v116 = vsel %vm114, 1, 0
    %v117 = vsel %vm115, 1, 0
    %v118 = vcvt.s32.f32 %v116
    %v119 = vcvt.s32.f32 %v117
    %v120 = vld [vmem:[#allocation5] sm:$0xff]
    %v121 = vld [vmem:[#allocation5 + $0x8] sm:$0xff]
    %123 = vset.pattern.permute.xlu0 0
    %124 = vperm.xlu0 %123, %v118
    %v125 = vpop.permute.xlu0 %124
    %128 = vset.pattern.permute.xlu0 0
    %129 = vperm.xlu0 %128, %v119
    %v130 = vpop.permute.xlu0 %129
    %v132 = vmul.f32 %v125, %v120
    %v133 = vmul.f32 %v130, %v121
    %v134 = vld [vmem:[#allocation11] sm:$0xff]
    %v135 = vld [vmem:[#allocation11 + $0x8] sm:$0xff]
    %v136 = vld [vmem:[#allocation11 + $0x10] sm:$0xff]
    %v137 = vld [vmem:[#allocation11 + $0x18] sm:$0xff]
    %v138 = vld [vmem:[%s7] sm:$0xff]
    %v139 = vld [vmem:[%s7 + $0x8] sm:$0xff]
    %v140 = vld [vmem:[#allocation2] sm:$0xff]
    %v141 = vld [vmem:[#allocation2 + $0x8] sm:$0xff]
    %v142 = vld [vmem:[#allocation8] sm:$0xff]
    %v143 = vld [vmem:[#allocation8 + $0x8] sm:$0xff]
    %v144 = vld [vmem:[#allocation8 + $0x10] sm:$0xff]
    %v145 = vld [vmem:[#allocation8 + $0x18] sm:$0xff]
    %v146 = vld [vmem:[#allocation8 + $0x20] sm:$0xff]
    %v147 = vld [vmem:[#allocation8 + $0x28] sm:$0xff]
    %v148 = vld [vmem:[#allocation8 + $0x30] sm:$0xff]
    %v149 = vld [vmem:[#allocation8 + $0x38] sm:$0xff]
    %v150 = vld [vmem:[#allocation10] sm:$0xff]
    %v151 = vld [vmem:[#allocation10 + $0x8] sm:$0xff]
    %v152 = vld [vmem:[#allocation10 + $0x10] sm:$0xff]
    %v153 = vld [vmem:[#allocation10 + $0x18] sm:$0xff]
    %v154 = vld [vmem:[%s5] sm:$0x1]
    %156 = vset.pattern.permute.xlu0 0
    %157 = vperm.xlu0 %156, %v112
    %v158 = vpop.permute.xlu0 %157
    %161 = vset.pattern.permute.xlu0 0
    %162 = vperm.xlu0 %161, %v113
    %v163 = vpop.permute.xlu0 %162
    %v165 = vmul.f32 %v158, %v140
    %v166 = vmul.f32 %v163, %v141
    %169 = vrot.lane.b32.xlu0 %v132, 32
    %v170 = vpop.permute.xlu0 %169
    %171 = vrot.lane.b32.xlu0 %v133, 32
    %v172 = vpop.permute.xlu0 %171
    %vm175 = vcmask 261120
    %v176 = vsel %vm175, %v165, %v170
    %v177 = vsel %vm175, %v166, %v172
    %v179 = vlaneseq
    %v180 = vshrl.u32 %v179, 7
    %v181 = vsub.s32 0, %v180
    %v182 = vrot.slane %v154, %v181
    %v184 = vmul.f32 %v125, %v182
    %v185 = vmul.f32 %v130, %v182
    %vm186 = vcmask 523264
    %v188 = vsel %vm186, %v176, 0
    %v191 = vsel %vm186, %v177, 0
    %193 = vmatprep.subr.mxu0 0.0
    %194 = vmatpush1.msra.mxu0 %v142
    %195 = vmatprep.subr.mxu0 0.0
    %196 = vmatpush1.msra.mxu0 %v143
    %197 = vmatprep.subr.mxu0 0.0
    %198 = vmatpush1.msra.mxu0 %v144
    %199 = vmatprep.subr.mxu0 0.0
    %200 = vmatpush1.msra.mxu0 %v145
    %201 = vmatprep.subr.mxu0 0.0
    %202 = vmatpush1.msra.mxu0 %v146
    %203 = vmatprep.subr.mxu0 0.0
    %204 = vmatpush1.msra.mxu0 %v147
    %205 = vmatprep.subr.mxu0 0.0
    %206 = vmatpush1.msra.mxu0 %v148
    %207 = vmatprep.subr.mxu0 0.0
    %208 = vmatpush1.msra.mxu0 %v149
    %209 = vmatprep.subr.mxu0 0.0
    %210 = vmatpush1.msra.mxu0 0.0
    %211 = vmatprep.subr.mxu0 0.0
    %212 = vmatpush1.msra.mxu0 0.0
    %213 = vmatprep.subr.mxu0 0.0
    %214 = vmatpush1.msra.mxu0 0.0
    %215 = vmatprep.subr.mxu0 0.0
    %216 = vmatpush1.msra.mxu0 0.0
    %217 = vmatprep.subr.mxu0 0.0
    %218 = vmatpush1.msra.mxu0 0.0
    %219 = vmatprep.subr.mxu0 0.0
    %220 = vmatpush1.msra.mxu0 0.0
    %221 = vmatprep.subr.mxu0 0.0
    %222 = vmatpush1.msra.mxu0 0.0
    %223 = vmatprep.subr.mxu0 0.0
    %224 = vmatpush1.msra.mxu0 0.0
    %225 = vmatprep.subr.mxu0 0.0
    %226 = vmatpush1.msra.mxu0 0.0
    %227 = vmatprep.subr.mxu0 0.0
    %228 = vmatpush1.msra.mxu0 0.0
    %229 = vmatprep.subr.mxu0 0.0
    %230 = vmatpush1.msra.mxu0 0.0
    %231 = vmatprep.subr.mxu0 0.0
    %232 = vmatpush1.msra.mxu0 0.0
    %233 = vmatprep.subr.mxu0 0.0
    %234 = vmatpush1.msra.mxu0 0.0
    %235 = vmatprep.subr.mxu0 0.0
    %236 = vmatpush1.msra.mxu0 0.0
    %237 = vmatprep.subr.mxu0 0.0
    %238 = vmatpush1.msra.mxu0 0.0
    %239 = vmatprep.subr.mxu0 0.0
    %240 = vmatpush1.msra.mxu0 0.0
    %241 = vmatprep.subr.mxu0 0.0
    %242 = vmatpush1.msra.mxu0 0.0
    %243 = vmatprep.subr.mxu0 0.0
    %244 = vmatpush1.msra.mxu0 0.0
    %245 = vmatprep.subr.mxu0 0.0
    %246 = vmatpush1.msra.mxu0 0.0
    %247 = vmatprep.subr.mxu0 0.0
    %248 = vmatpush1.msra.mxu0 0.0
    %249 = vmatprep.subr.mxu0 0.0
    %250 = vmatpush1.msra.mxu0 0.0
    %251 = vmatprep.subr.mxu0 0.0
    %252 = vmatpush1.msra.mxu0 0.0
    %253 = vmatprep.subr.mxu0 0.0
    %254 = vmatpush1.msra.mxu0 0.0
    %255 = vmatprep.subr.mxu0 0.0
    %256 = vmatpush1.msra.mxu0 0.0
    %257 = vmatprep.mubr.f32.mxu0 0.0
    %258 = vmatmul.mubr.f32.gmra.mrb[0].mxu0 %v188
    %v259 = vpop.f32.mrb[0].mxu0
    %v260 = vadd.f32 %v184, %v259
    %v261 = vpop.f32.mrb[0].mxu0
    %262 = vmatprep.mubr.f32.mxu0 0.0
    %263 = vmatmul.mubr.f32.gmra.mrb[0].mxu0 %v191
    %v264 = vpop.f32.mrb[0].mxu0
    %v265 = vadd.f32 %v185, %v264
    %v266 = vpop.f32.mrb[0].mxu0
    %267 = vdwg.mxu0
    %vm268 = vcmask 130048
    %v270 = vsel %vm268, %v134, 0
    %v273 = vsel %vm268, %v135, 0
    %v276 = vsel %vm268, %v136, 0
    %v279 = vsel %vm268, %v137, 0
    %281 = vmatprep.subr.mxu0 0.0
    %282 = vmatpush1.msra.mxu0 %v260
    %283 = vmatprep.subr.mxu0 0.0
    %284 = vmatpush1.msra.mxu0 %v265
    %285 = vmatprep.subr.mxu0 0.0
    %286 = vmatpush1.msra.mxu0 0.0
    %287 = vmatprep.subr.mxu0 0.0
    %288 = vmatpush1.msra.mxu0 0.0
    %289 = vmatprep.subr.mxu0 0.0
    %290 = vmatpush1.msra.mxu0 0.0
    %291 = vmatprep.subr.mxu0 0.0
    %292 = vmatpush1.msra.mxu0 0.0
    %293 = vmatprep.subr.mxu0 0.0
    %294 = vmatpush1.msra.mxu0 0.0
    %295 = vmatprep.subr.mxu0 0.0
    %296 = vmatpush1.msra.mxu0 0.0
    %297 = vmatprep.subr.mxu0 0.0
    %298 = vmatpush1.msra.mxu0 0.0
    %299 = vmatprep.subr.mxu0 0.0
    %300 = vmatpush1.msra.mxu0 0.0
    %301 = vmatprep.subr.mxu0 0.0
    %302 = vmatpush1.msra.mxu0 0.0
    %303 = vmatprep.subr.mxu0 0.0
    %304 = vmatpush1.msra.mxu0 0.0
    %305 = vmatprep.subr.mxu0 0.0
    %306 = vmatpush1.msra.mxu0 0.0
    %307 = vmatprep.subr.mxu0 0.0
    %308 = vmatpush1.msra.mxu0 0.0
    %309 = vmatprep.subr.mxu0 0.0
    %310 = vmatpush1.msra.mxu0 0.0
    %311 = vmatprep.subr.mxu0 0.0
    %312 = vmatpush1.msra.mxu0 0.0
    %313 = vmatprep.subr.mxu0 0.0
    %314 = vmatpush1.msra.mxu0 0.0
    %315 = vmatprep.subr.mxu0 0.0
    %316 = vmatpush1.msra.mxu0 0.0
    %317 = vmatprep.subr.mxu0 0.0
    %318 = vmatpush1.msra.mxu0 0.0
    %319 = vmatprep.subr.mxu0 0.0
    %320 = vmatpush1.msra.mxu0 0.0
    %321 = vmatprep.subr.mxu0 0.0
    %322 = vmatpush1.msra.mxu0 0.0
    %323 = vmatprep.subr.mxu0 0.0
    %324 = vmatpush1.msra.mxu0 0.0
    %325 = vmatprep.subr.mxu0 0.0
    %326 = vmatpush1.msra.mxu0 0.0
    %327 = vmatprep.subr.mxu0 0.0
    %328 = vmatpush1.msra.mxu0 0.0
    %329 = vmatprep.subr.mxu0 0.0
    %330 = vmatpush1.msra.mxu0 0.0
    %331 = vmatprep.subr.mxu0 0.0
    %332 = vmatpush1.msra.mxu0 0.0
    %333 = vmatprep.subr.mxu0 0.0
    %334 = vmatpush1.msra.mxu0 0.0
    %335 = vmatprep.subr.mxu0 0.0
    %336 = vmatpush1.msra.mxu0 0.0
    %337 = vmatprep.subr.mxu0 0.0
    %338 = vmatpush1.msra.mxu0 0.0
    %339 = vmatprep.subr.mxu0 0.0
    %340 = vmatpush1.msra.mxu0 0.0
    %341 = vmatprep.subr.mxu0 0.0
    %342 = vmatpush1.msra.mxu0 0.0
    %343 = vmatprep.subr.mxu0 0.0
    %344 = vmatpush1.msra.mxu0 0.0
    %345 = vmatprep.mubr.f32.mxu0 0.0
    %346 = vmatmul.mubr.f32.gmra.mrb[0].mxu0 %v270
    %v347 = vpop.f32.mrb[0].mxu0
    %v348 = vadd.f32 0.0, %v347
    %v349 = vpop.f32.mrb[0].mxu0
    %350 = vmatprep.mubr.f32.mxu0 0.0
    %351 = vmatmul.mubr.f32.gmra.mrb[0].mxu0 %v273
    %v352 = vpop.f32.mrb[0].mxu0
    %v353 = vadd.f32 0.0, %v352
    %v354 = vpop.f32.mrb[0].mxu0
    %355 = vmatprep.mubr.f32.mxu0 0.0
    %356 = vmatmul.mubr.f32.gmra.mrb[0].mxu0 %v276
    %v357 = vpop.f32.mrb[0].mxu0
    %v358 = vadd.f32 0.0, %v357
    %v359 = vpop.f32.mrb[0].mxu0
    %360 = vmatprep.mubr.f32.mxu0 0.0
    %361 = vmatmul.mubr.f32.gmra.mrb[0].mxu0 %v279
    %v362 = vpop.f32.mrb[0].mxu0
    %v363 = vadd.f32 0.0, %v362
    %v364 = vpop.f32.mrb[0].mxu0
    %365 = vdwg.mxu0
    %v366 = vtanh.pop %v348
    %v367 = vtanh.pop %v353
    %v368 = vtanh.pop %v358
    %v369 = vtanh.pop %v363
    %v371 = vsel %vm175, %v138, 0
    %v374 = vsel %vm175, %v139, 0
    %376 = vmatprep.subr.mxu0 0.0
    %377 = vmatpush1.msra.mxu0 %v366
    %378 = vmatprep.subr.mxu0 0.0
    %379 = vmatpush1.msra.mxu0 %v367
    %380 = vmatprep.subr.mxu0 0.0
    %381 = vmatpush1.msra.mxu0 %v368
    %382 = vmatprep.subr.mxu0 0.0
    %383 = vmatpush1.msra.mxu0 %v369
    %384 = vmatprep.subr.mxu0 0.0
    %385 = vmatpush1.msra.mxu0 0.0
    %386 = vmatprep.subr.mxu0 0.0
    %387 = vmatpush1.msra.mxu0 0.0
    %388 = vmatprep.subr.mxu0 0.0
    %389 = vmatpush1.msra.mxu0 0.0
    %390 = vmatprep.subr.mxu0 0.0
    %391 = vmatpush1.msra.mxu0 0.0
    %392 = vmatprep.subr.mxu0 0.0
    %393 = vmatpush1.msra.mxu0 0.0
    %394 = vmatprep.subr.mxu0 0.0
    %395 = vmatpush1.msra.mxu0 0.0
    %396 = vmatprep.subr.mxu0 0.0
    %397 = vmatpush1.msra.mxu0 0.0
    %398 = vmatprep.subr.mxu0 0.0
    %399 = vmatpush1.msra.mxu0 0.0
    %400 = vmatprep.subr.mxu0 0.0
    %401 = vmatpush1.msra.mxu0 0.0
    %402 = vmatprep.subr.mxu0 0.0
    %403 = vmatpush1.msra.mxu0 0.0
    %404 = vmatprep.subr.mxu0 0.0
    %405 = vmatpush1.msra.mxu0 0.0
    %406 = vmatprep.subr.mxu0 0.0
    %407 = vmatpush1.msra.mxu0 0.0
    %408 = vmatprep.subr.mxu0 0.0
    %409 = vmatpush1.msra.mxu0 0.0
    %410 = vmatprep.subr.mxu0 0.0
    %411 = vmatpush1.msra.mxu0 0.0
    %412 = vmatprep.subr.mxu0 0.0
    %413 = vmatpush1.msra.mxu0 0.0
    %414 = vmatprep.subr.mxu0 0.0
    %415 = vmatpush1.msra.mxu0 0.0
    %416 = vmatprep.subr.mxu0 0.0
    %417 = vmatpush1.msra.mxu0 0.0
    %418 = vmatprep.subr.mxu0 0.0
    %419 = vmatpush1.msra.mxu0 0.0
    %420 = vmatprep.subr.mxu0 0.0
    %421 = vmatpush1.msra.mxu0 0.0
    %422 = vmatprep.subr.mxu0 0.0
    %423 = vmatpush1.msra.mxu0 0.0
    %424 = vmatprep.subr.mxu0 0.0
    %425 = vmatpush1.msra.mxu0 0.0
    %426 = vmatprep.subr.mxu0 0.0
    %427 = vmatpush1.msra.mxu0 0.0
    %428 = vmatprep.subr.mxu0 0.0
    %429 = vmatpush1.msra.mxu0 0.0
    %430 = vmatprep.subr.mxu0 0.0
    %431 = vmatpush1.msra.mxu0 0.0
    %432 = vmatprep.subr.mxu0 0.0
    %433 = vmatpush1.msra.mxu0 0.0
    %434 = vmatprep.subr.mxu0 0.0
    %435 = vmatpush1.msra.mxu0 0.0
    %436 = vmatprep.subr.mxu0 0.0
    %437 = vmatpush1.msra.mxu0 0.0
    %438 = vmatprep.subr.mxu0 0.0
    %439 = vmatpush1.msra.mxu0 0.0
    %440 = vmatprep.mubr.f32.mxu0 0.0
    %441 = vmatmul.mubr.f32.gmra.mrb[0].mxu0 %v371
    %v442 = vpop.f32.mrb[0].mxu0
    %v443 = vadd.f32 0.0, %v442
    %v444 = vpop.f32.mrb[0].mxu0
    %445 = vmatprep.mubr.f32.mxu0 0.0
    %446 = vmatmul.mubr.f32.gmra.mrb[0].mxu0 %v374
    %v447 = vpop.f32.mrb[0].mxu0
    %v448 = vadd.f32 0.0, %v447
    %v449 = vpop.f32.mrb[0].mxu0
    %450 = vdwg.mxu0
    %v451 = vmul.f32 %v158, %v443
    %v452 = vmul.f32 %v163, %v448
    %v454 = vsel %vm175, %v451, 0
    %v457 = vsel %vm175, %v452, 0
    %459 = vmatprep.subr.mxu0 0.0
    %460 = vmatpush1.msra.mxu0 %v150
    %461 = vmatprep.subr.mxu0 0.0
    %462 = vmatpush1.msra.mxu0 %v151
    %463 = vmatprep.subr.mxu0 0.0
    %464 = vmatpush1.msra.mxu0 %v152
    %465 = vmatprep.subr.mxu0 0.0
    %466 = vmatpush1.msra.mxu0 %v153
    %467 = vmatprep.subr.mxu0 0.0
    %468 = vmatpush1.msra.mxu0 0.0
    %469 = vmatprep.subr.mxu0 0.0
    %470 = vmatpush1.msra.mxu0 0.0
    %471 = vmatprep.subr.mxu0 0.0
    %472 = vmatpush1.msra.mxu0 0.0
    %473 = vmatprep.subr.mxu0 0.0
    %474 = vmatpush1.msra.mxu0 0.0
    %475 = vmatprep.subr.mxu0 0.0
    %476 = vmatpush1.msra.mxu0 0.0
    %477 = vmatprep.subr.mxu0 0.0
    %478 = vmatpush1.msra.mxu0 0.0
    %479 = vmatprep.subr.mxu0 0.0
    %480 = vmatpush1.msra.mxu0 0.0
    %481 = vmatprep.subr.mxu0 0.0
    %482 = vmatpush1.msra.mxu0 0.0
    %483 = vmatprep.subr.mxu0 0.0
    %484 = vmatpush1.msra.mxu0 0.0
    %485 = vmatprep.subr.mxu0 0.0
    %486 = vmatpush1.msra.mxu0 0.0
    %487 = vmatprep.subr.mxu0 0.0
    %488 = vmatpush1.msra.mxu0 0.0
    %489 = vmatprep.subr.mxu0 0.0
    %490 = vmatpush1.msra.mxu0 0.0
    %491 = vmatprep.subr.mxu0 0.0
    %492 = vmatpush1.msra.mxu0 0.0
    %493 = vmatprep.subr.mxu0 0.0
    %494 = vmatpush1.msra.mxu0 0.0
    %495 = vmatprep.subr.mxu0 0.0
    %496 = vmatpush1.msra.mxu0 0.0
    %497 = vmatprep.subr.mxu0 0.0
    %498 = vmatpush1.msra.mxu0 0.0
    %499 = vmatprep.subr.mxu0 0.0
    %500 = vmatpush1.msra.mxu0 0.0
    %501 = vmatprep.subr.mxu0 0.0
    %502 = vmatpush1.msra.mxu0 0.0
    %503 = vmatprep.subr.mxu0 0.0
    %504 = vmatpush1.msra.mxu0 0.0
    %505 = vmatprep.subr.mxu0 0.0
    %506 = vmatpush1.msra.mxu0 0.0
    %507 = vmatprep.subr.mxu0 0.0
    %508 = vmatpush1.msra.mxu0 0.0
    %509 = vmatprep.subr.mxu0 0.0
    %510 = vmatpush1.msra.mxu0 0.0
    %511 = vmatprep.subr.mxu0 0.0
    %512 = vmatpush1.msra.mxu0 0.0
    %513 = vmatprep.subr.mxu0 0.0
    %514 = vmatpush1.msra.mxu0 0.0
    %515 = vmatprep.subr.mxu0 0.0
    %516 = vmatpush1.msra.mxu0 0.0
    %517 = vmatprep.subr.mxu0 0.0
    %518 = vmatpush1.msra.mxu0 0.0
    %519 = vmatprep.subr.mxu0 0.0
    %520 = vmatpush1.msra.mxu0 0.0
    %521 = vmatprep.subr.mxu0 0.0
    %522 = vmatpush1.msra.mxu0 0.0
    %523 = vmatprep.mubr.f32.mxu0 0.0
    %524 = vmatmul.mubr.f32.gmra.mrb[0].mxu0 %v454
    %v525 = vpop.f32.mrb[0].mxu0
    %v526 = vadd.f32 0.0, %v525
    %v527 = vpop.f32.mrb[0].mxu0
    %528 = vmatprep.mubr.f32.mxu0 0.0
    %529 = vmatmul.mubr.f32.gmra.mrb[0].mxu0 %v457
    %v530 = vpop.f32.mrb[0].mxu0
    %v531 = vadd.f32 0.0, %v530
    %v532 = vpop.f32.mrb[0].mxu0
    %533 = vdwg.mxu0
    %v534 = vsub.f32 0.0, %v526
    %v535 = vsub.f32 0.0, %v531
    %v536 = vmul.f32 %v534, 0.5
    %v537 = vmul.f32 %v535, 0.5
    %v538 = vmul.f32 %v140, 0.5
    %v539 = vmul.f32 %v141, 0.5
    %v540 = vadd.f32 %v536, %v538
    %v541 = vadd.f32 %v537, %v539
    %s542 = scalar_lea.vmem [#allocation8], 64
    %v543 = vld [vmem:[%s542] sm:$0xff]
    %v544 = vld [vmem:[%s542 + $0x8] sm:$0xff]
    %v545 = vld [vmem:[%s542 + $0x10] sm:$0xff]
    %v546 = vld [vmem:[%s542 + $0x18] sm:$0xff]
    %v547 = vld [vmem:[%s542 + $0x20] sm:$0xff]
    %v548 = vld [vmem:[%s542 + $0x28] sm:$0xff]
    %v549 = vld [vmem:[%s542 + $0x30] sm:$0xff]
    %v550 = vld [vmem:[%s542 + $0x38] sm:$0xff]
    %s551 = scalar_lea.vmem [#allocation10], 32
    %v552 = vld [vmem:[%s551] sm:$0xff]
    %v553 = vld [vmem:[%s551 + $0x8] sm:$0xff]
    %v554 = vld [vmem:[%s551 + $0x10] sm:$0xff]
    %v555 = vld [vmem:[%s551 + $0x18] sm:$0xff]
    %s556 = scalar_lea.vmem %s5, 1
    %v557 = vld [vmem:[%s556] sm:$0x1]
    %v558 = vmul.f32 %v158, %v540
    %v559 = vmul.f32 %v163, %v541
    %v560 = vsel %vm175, %v558, %v170
    %v561 = vsel %vm175, %v559, %v172
    %v563 = vlaneseq
    %v564 = vshrl.u32 %v563, 7
    %v565 = vsub.s32 0, %v564
    %v566 = vrot.slane %v557, %v565
    %v568 = vmul.f32 %v125, %v566
    %v569 = vmul.f32 %v130, %v566
    %v571 = vsel %vm186, %v560, 0
    %v574 = vsel %vm186, %v561, 0
    %576 = vmatprep.subr.mxu0 0.0
    %577 = vmatpush1.msra.mxu0 %v543
    %578 = vmatprep.subr.mxu0 0.0
    %579 = vmatpush1.msra.mxu0 %v544
    %580 = vmatprep.subr.mxu0 0.0
    %581 = vmatpush1.msra.mxu0 %v545
    %582 = vmatprep.subr.mxu0 0.0
    %583 = vmatpush1.msra.mxu0 %v546
    %584 = vmatprep.subr.mxu0 0.0
    %585 = vmatpush1.msra.mxu0 %v547
    %586 = vmatprep.subr.mxu0 0.0
    %587 = vmatpush1.msra.mxu0 %v548
    %588 = vmatprep.subr.mxu0 0.0
    %589 = vmatpush1.msra.mxu0 %v549
    %590 = vmatprep.subr.mxu0 0.0
    %591 = vmatpush1.msra.mxu0 %v550
    %592 = vmatprep.subr.mxu0 0.0
    %593 = vmatpush1.msra.mxu0 0.0
    %594 = vmatprep.subr.mxu0 0.0
    %595 = vmatpush1.msra.mxu0 0.0
    %596 = vmatprep.subr.mxu0 0.0
    %597 = vmatpush1.msra.mxu0 0.0
    %598 = vmatprep.subr.mxu0 0.0
    %599 = vmatpush1.msra.mxu0 0.0
    %600 = vmatprep.subr.mxu0 0.0
    %601 = vmatpush1.msra.mxu0 0.0
    %602 = vmatprep.subr.mxu0 0.0
    %603 = vmatpush1.msra.mxu0 0.0
    %604 = vmatprep.subr.mxu0 0.0
    %605 = vmatpush1.msra.mxu0 0.0
    %606 = vmatprep.subr.mxu0 0.0
    %607 = vmatpush1.msra.mxu0 0.0
    %608 = vmatprep.subr.mxu0 0.0
    %609 = vmatpush1.msra.mxu0 0.0
    %610 = vmatprep.subr.mxu0 0.0
    %611 = vmatpush1.msra.mxu0 0.0
    %612 = vmatprep.subr.mxu0 0.0
    %613 = vmatpush1.msra.mxu0 0.0
    %614 = vmatprep.subr.mxu0 0.0
    %615 = vmatpush1.msra.mxu0 0.0
    %616 = vmatprep.subr.mxu0 0.0
    %617 = vmatpush1.msra.mxu0 0.0
    %618 = vmatprep.subr.mxu0 0.0
    %619 = vmatpush1.msra.mxu0 0.0
    %620 = vmatprep.subr.mxu0 0.0
    %621 = vmatpush1.msra.mxu0 0.0
    %622 = vmatprep.subr.mxu0 0.0
    %623 = vmatpush1.msra.mxu0 0.0
    %624 = vmatprep.subr.mxu0 0.0
    %625 = vmatpush1.msra.mxu0 0.0
    %626 = vmatprep.subr.mxu0 0.0
    %627 = vmatpush1.msra.mxu0 0.0
    %628 = vmatprep.subr.mxu0 0.0
    %629 = vmatpush1.msra.mxu0 0.0
    %630 = vmatprep.subr.mxu0 0.0
    %631 = vmatpush1.msra.mxu0 0.0
    %632 = vmatprep.subr.mxu0 0.0
    %633 = vmatpush1.msra.mxu0 0.0
    %634 = vmatprep.subr.mxu0 0.0
    %635 = vmatpush1.msra.mxu0 0.0
    %636 = vmatprep.subr.mxu0 0.0
    %637 = vmatpush1.msra.mxu0 0.0
    %638 = vmatprep.subr.mxu0 0.0
    %639 = vmatpush1.msra.mxu0 0.0
    %640 = vmatprep.mubr.f32.mxu0 0.0
    %641 = vmatmul.mubr.f32.gmra.mrb[0].mxu0 %v571
    %v642 = vpop.f32.mrb[0].mxu0
    %v643 = vadd.f32 %v568, %v642
    %v644 = vpop.f32.mrb[0].mxu0
    %645 = vmatprep.mubr.f32.mxu0 0.0
    %646 = vmatmul.mubr.f32.gmra.mrb[0].mxu0 %v574
    %v647 = vpop.f32.mrb[0].mxu0
    %v648 = vadd.f32 %v569, %v647
    %v649 = vpop.f32.mrb[0].mxu0
    %650 = vdwg.mxu0
    %651 = vmatprep.subr.mxu0 0.0
    %652 = vmatpush1.msra.mxu0 %v643
    %653 = vmatprep.subr.mxu0 0.0
    %654 = vmatpush1.msra.mxu0 %v648
    %655 = vmatprep.subr.mxu0 0.0
    %656 = vmatpush1.msra.mxu0 0.0
    %657 = vmatprep.subr.mxu0 0.0
    %658 = vmatpush1.msra.mxu0 0.0
    %659 = vmatprep.subr.mxu0 0.0
    %660 = vmatpush1.msra.mxu0 0.0
    %661 = vmatprep.subr.mxu0 0.0
    %662 = vmatpush1.msra.mxu0 0.0
    %663 = vmatprep.subr.mxu0 0.0
    %664 = vmatpush1.msra.mxu0 0.0
    %665 = vmatprep.subr.mxu0 0.0
    %666 = vmatpush1.msra.mxu0 0.0
    %667 = vmatprep.subr.mxu0 0.0
    %668 = vmatpush1.msra.mxu0 0.0
    %669 = vmatprep.subr.mxu0 0.0
    %670 = vmatpush1.msra.mxu0 0.0
    %671 = vmatprep.subr.mxu0 0.0
    %672 = vmatpush1.msra.mxu0 0.0
    %673 = vmatprep.subr.mxu0 0.0
    %674 = vmatpush1.msra.mxu0 0.0
    %675 = vmatprep.subr.mxu0 0.0
    %676 = vmatpush1.msra.mxu0 0.0
    %677 = vmatprep.subr.mxu0 0.0
    %678 = vmatpush1.msra.mxu0 0.0
    %679 = vmatprep.subr.mxu0 0.0
    %680 = vmatpush1.msra.mxu0 0.0
    %681 = vmatprep.subr.mxu0 0.0
    %682 = vmatpush1.msra.mxu0 0.0
    %683 = vmatprep.subr.mxu0 0.0
    %684 = vmatpush1.msra.mxu0 0.0
    %685 = vmatprep.subr.mxu0 0.0
    %686 = vmatpush1.msra.mxu0 0.0
    %687 = vmatprep.subr.mxu0 0.0
    %688 = vmatpush1.msra.mxu0 0.0
    %689 = vmatprep.subr.mxu0 0.0
    %690 = vmatpush1.msra.mxu0 0.0
    %691 = vmatprep.subr.mxu0 0.0
    %692 = vmatpush1.msra.mxu0 0.0
    %693 = vmatprep.subr.mxu0 0.0
    %694 = vmatpush1.msra.mxu0 0.0
    %695 = vmatprep.subr.mxu0 0.0
    %696 = vmatpush1.msra.mxu0 0.0
    %697 = vmatprep.subr.mxu0 0.0
    %698 = vmatpush1.msra.mxu0 0.0
    %699 = vmatprep.subr.mxu0 0.0
    %700 = vmatpush1.msra.mxu0 0.0
    %701 = vmatprep.subr.mxu0 0.0
    %702 = vmatpush1.msra.mxu0 0.0
    %703 = vmatprep.subr.mxu0 0.0
    %704 = vmatpush1.msra.mxu0 0.0
    %705 = vmatprep.subr.mxu0 0.0
    %706 = vmatpush1.msra.mxu0 0.0
    %707 = vmatprep.subr.mxu0 0.0
    %708 = vmatpush1.msra.mxu0 0.0
    %709 = vmatprep.subr.mxu0 0.0
    %710 = vmatpush1.msra.mxu0 0.0
    %711 = vmatprep.subr.mxu0 0.0
    %712 = vmatpush1.msra.mxu0 0.0
    %713 = vmatprep.subr.mxu0 0.0
    %714 = vmatpush1.msra.mxu0 0.0
    %715 = vmatprep.mubr.f32.mxu0 0.0
    %716 = vmatmul.mubr.f32.gmra.mrb[0].mxu0 %v270
    %v717 = vpop.f32.mrb[0].mxu0
    %v718 = vadd.f32 0.0, %v717
    %v719 = vpop.f32.mrb[0].mxu0
    %720 = vmatprep.mubr.f32.mxu0 0.0
    %721 = vmatmul.mubr.f32.gmra.mrb[0].mxu0 %v273
    %v722 = vpop.f32.mrb[0].mxu0
    %v723 = vadd.f32 0.0, %v722
    %v724 = vpop.f32.mrb[0].mxu0
    %725 = vmatprep.mubr.f32.mxu0 0.0
    %726 = vmatmul.mubr.f32.gmra.mrb[0].mxu0 %v276
    %v727 = vpop.f32.mrb[0].mxu0
    %v728 = vadd.f32 0.0, %v727
    %v729 = vpop.f32.mrb[0].mxu0
    %730 = vmatprep.mubr.f32.mxu0 0.0
    %731 = vmatmul.mubr.f32.gmra.mrb[0].mxu0 %v279
    %v732 = vpop.f32.mrb[0].mxu0
    %v733 = vadd.f32 0.0, %v732
    %v734 = vpop.f32.mrb[0].mxu0
    %735 = vdwg.mxu0
    %v736 = vtanh.pop %v718
    %v737 = vtanh.pop %v723
    %v738 = vtanh.pop %v728
    %v739 = vtanh.pop %v733
    %740 = vmatprep.subr.mxu0 0.0
    %741 = vmatpush1.msra.mxu0 %v736
    %742 = vmatprep.subr.mxu0 0.0
    %743 = vmatpush1.msra.mxu0 %v737
    %744 = vmatprep.subr.mxu0 0.0
    %745 = vmatpush1.msra.mxu0 %v738
    %746 = vmatprep.subr.mxu0 0.0
    %747 = vmatpush1.msra.mxu0 %v739
    %748 = vmatprep.subr.mxu0 0.0
    %749 = vmatpush1.msra.mxu0 0.0
    %750 = vmatprep.subr.mxu0 0.0
    %751 = vmatpush1.msra.mxu0 0.0
    %752 = vmatprep.subr.mxu0 0.0
    %753 = vmatpush1.msra.mxu0 0.0
    %754 = vmatprep.subr.mxu0 0.0
    %755 = vmatpush1.msra.mxu0 0.0
    %756 = vmatprep.subr.mxu0 0.0
    %757 = vmatpush1.msra.mxu0 0.0
    %758 = vmatprep.subr.mxu0 0.0
    %759 = vmatpush1.msra.mxu0 0.0
    %760 = vmatprep.subr.mxu0 0.0
    %761 = vmatpush1.msra.mxu0 0.0
    %762 = vmatprep.subr.mxu0 0.0
    %763 = vmatpush1.msra.mxu0 0.0
    %764 = vmatprep.subr.mxu0 0.0
    %765 = vmatpush1.msra.mxu0 0.0
    %766 = vmatprep.subr.mxu0 0.0
    %767 = vmatpush1.msra.mxu0 0.0
    %768 = vmatprep.subr.mxu0 0.0
    %769 = vmatpush1.msra.mxu0 0.0
    %770 = vmatprep.subr.mxu0 0.0
    %771 = vmatpush1.msra.mxu0 0.0
    %772 = vmatprep.subr.mxu0 0.0
    %773 = vmatpush1.msra.mxu0 0.0
    %774 = vmatprep.subr.mxu0 0.0
    %775 = vmatpush1.msra.mxu0 0.0
    %776 = vmatprep.subr.mxu0 0.0
    %777 = vmatpush1.msra.mxu0 0.0
    %778 = vmatprep.subr.mxu0 0.0
    %779 = vmatpush1.msra.mxu0 0.0
    %780 = vmatprep.subr.mxu0 0.0
    %781 = vmatpush1.msra.mxu0 0.0
    %782 = vmatprep.subr.mxu0 0.0
    %783 = vmatpush1.msra.mxu0 0.0
    %784 = vmatprep.subr.mxu0 0.0
    %785 = vmatpush1.msra.mxu0 0.0
    %786 = vmatprep.subr.mxu0 0.0
    %787 = vmatpush1.msra.mxu0 0.0
    %788 = vmatprep.subr.mxu0 0.0
    %789 = vmatpush1.msra.mxu0 0.0
    %790 = vmatprep.subr.mxu0 0.0
    %791 = vmatpush1.msra.mxu0 0.0
    %792 = vmatprep.subr.mxu0 0.0
    %793 = vmatpush1.msra.mxu0 0.0
    %794 = vmatprep.subr.mxu0 0.0
    %795 = vmatpush1.msra.mxu0 0.0
    %796 = vmatprep.subr.mxu0 0.0
    %797 = vmatpush1.msra.mxu0 0.0
    %798 = vmatprep.subr.mxu0 0.0
    %799 = vmatpush1.msra.mxu0 0.0
    %800 = vmatprep.subr.mxu0 0.0
    %801 = vmatpush1.msra.mxu0 0.0
    %802 = vmatprep.subr.mxu0 0.0
    %803 = vmatpush1.msra.mxu0 0.0
    %804 = vmatprep.mubr.f32.mxu0 0.0
    %805 = vmatmul.mubr.f32.gmra.mrb[0].mxu0 %v371
    %v806 = vpop.f32.mrb[0].mxu0
    %v807 = vadd.f32 0.0, %v806
    %v808 = vpop.f32.mrb[0].mxu0
    %809 = vmatprep.mubr.f32.mxu0 0.0
    %810 = vmatmul.mubr.f32.gmra.mrb[0].mxu0 %v374
    %v811 = vpop.f32.mrb[0].mxu0
    %v812 = vadd.f32 0.0, %v811
    %v813 = vpop.f32.mrb[0].mxu0
    %814 = vdwg.mxu0
    %v815 = vmul.f32 %v158, %v807
    %v816 = vmul.f32 %v163, %v812
    %v818 = vsel %vm175, %v815, 0
    %v821 = vsel %vm175, %v816, 0
    %823 = vmatprep.subr.mxu0 0.0
    %824 = vmatpush1.msra.mxu0 %v552
    %825 = vmatprep.subr.mxu0 0.0
    %826 = vmatpush1.msra.mxu0 %v553
    %827 = vmatprep.subr.mxu0 0.0
    %828 = vmatpush1.msra.mxu0 %v554
    %829 = vmatprep.subr.mxu0 0.0
    %830 = vmatpush1.msra.mxu0 %v555
    %831 = vmatprep.subr.mxu0 0.0
    %832 = vmatpush1.msra.mxu0 0.0
    %833 = vmatprep.subr.mxu0 0.0
    %834 = vmatpush1.msra.mxu0 0.0
    %835 = vmatprep.subr.mxu0 0.0
    %836 = vmatpush1.msra.mxu0 0.0
    %837 = vmatprep.subr.mxu0 0.0
    %838 = vmatpush1.msra.mxu0 0.0
    %839 = vmatprep.subr.mxu0 0.0
    %840 = vmatpush1.msra.mxu0 0.0
    %841 = vmatprep.subr.mxu0 0.0
    %842 = vmatpush1.msra.mxu0 0.0
    %843 = vmatprep.subr.mxu0 0.0
    %844 = vmatpush1.msra.mxu0 0.0
    %845 = vmatprep.subr.mxu0 0.0
    %846 = vmatpush1.msra.mxu0 0.0
    %847 = vmatprep.subr.mxu0 0.0
    %848 = vmatpush1.msra.mxu0 0.0
    %849 = vmatprep.subr.mxu0 0.0
    %850 = vmatpush1.msra.mxu0 0.0
    %851 = vmatprep.subr.mxu0 0.0
    %852 = vmatpush1.msra.mxu0 0.0
    %853 = vmatprep.subr.mxu0 0.0
    %854 = vmatpush1.msra.mxu0 0.0
    %855 = vmatprep.subr.mxu0 0.0
    %856 = vmatpush1.msra.mxu0 0.0
    %857 = vmatprep.subr.mxu0 0.0
    %858 = vmatpush1.msra.mxu0 0.0
    %859 = vmatprep.subr.mxu0 0.0
    %860 = vmatpush1.msra.mxu0 0.0
    %861 = vmatprep.subr.mxu0 0.0
    %862 = vmatpush1.msra.mxu0 0.0
    %863 = vmatprep.subr.mxu0 0.0
    %864 = vmatpush1.msra.mxu0 0.0
    %865 = vmatprep.subr.mxu0 0.0
    %866 = vmatpush1.msra.mxu0 0.0
    %867 = vmatprep.subr.mxu0 0.0
    %868 = vmatpush1.msra.mxu0 0.0
    %869 = vmatprep.subr.mxu0 0.0
    %870 = vmatpush1.msra.mxu0 0.0
    %871 = vmatprep.subr.mxu0 0.0
    %872 = vmatpush1.msra.mxu0 0.0
    %873 = vmatprep.subr.mxu0 0.0
    %874 = vmatpush1.msra.mxu0 0.0
    %875 = vmatprep.subr.mxu0 0.0
    %876 = vmatpush1.msra.mxu0 0.0
    %877 = vmatprep.subr.mxu0 0.0
    %878 = vmatpush1.msra.mxu0 0.0
    %879 = vmatprep.subr.mxu0 0.0
    %880 = vmatpush1.msra.mxu0 0.0
    %881 = vmatprep.subr.mxu0 0.0
    %882 = vmatpush1.msra.mxu0 0.0
    %883 = vmatprep.subr.mxu0 0.0
    %884 = vmatpush1.msra.mxu0 0.0
    %885 = vmatprep.subr.mxu0 0.0
    %886 = vmatpush1.msra.mxu0 0.0
    %887 = vmatprep.mubr.f32.mxu0 0.0
    %888 = vmatmul.mubr.f32.gmra.mrb[0].mxu0 %v818
    %v889 = vpop.f32.mrb[0].mxu0
    %v890 = vadd.f32 0.0, %v889
    %v891 = vpop.f32.mrb[0].mxu0
    %892 = vmatprep.mubr.f32.mxu0 0.0
    %893 = vmatmul.mubr.f32.gmra.mrb[0].mxu0 %v821
    %v894 = vpop.f32.mrb[0].mxu0
    %v895 = vadd.f32 0.0, %v894
    %v896 = vpop.f32.mrb[0].mxu0
    %897 = vdwg.mxu0
    %v898 = vsub.f32 0.0, %v890
    %v899 = vsub.f32 0.0, %v895
    %v900 = vmul.f32 %v898, 0.5
    %v901 = vmul.f32 %v899, 0.5
    %v902 = vmul.f32 %v540, 0.5
    %v903 = vmul.f32 %v541, 0.5
    %v904 = vadd.f32 %v900, %v902
    %v905 = vadd.f32 %v901, %v903
    %906 = vst.msk [vmem:[#allocation13] sm:$0xff] %vm175, %v904
    %907 = vst.msk [vmem:[#allocation13 + $0x8] sm:$0xff] %vm175, %v905
    // Predicated region
    $region58: #{forward.1} parent=1 // pred_check
      _
    $region59: #{forward.1} parent=1 // pred_check_branch
      %909 = sbr.rel (0) target = $region61
    $region60: #{forward.1} parent=1 // pred_region
      %s911 = ssub.s32 256, 256
      %912 = vsyncadd [#allocation4], %s911
      %s913 = sshll.u32 [#allocation13], 4
      %s914 = int_to_ptr.vmem [resolvable:$true] %s913
      %919 = dma.vmem_to_hbm [thread:$0]  %s914, 256, %s8, [#allocation4], 128, 128, 8
    $region61: #{forward.1} parent=1 // pred_fallthru
      _
    // Predicated region
    $region62: #{forward.1} parent=1 // pred_check
      _
    $region63: #{forward.1} parent=1 // pred_check_branch
      %921 = sbr.rel (0) target = $region65
    $region64: #{forward.1} parent=1 // pred_region
      %922 = dma.done [#allocation4], 256
    $region65: #{forward.1} parent=1 // pred_fallthru
      _
    %923 = vsyncpa [#allocation3], 1
    %924 = vsyncpa [#allocation6], 1
    %925 = vsyncpa [#allocation9], 1
    %926 = vsyncpa [#allocation12], 1
    %927 = vsyncpa [#allocation4], 1

</llo_original>
